<compile_context>
chip_gen: v5e
topology: v5e:2x2
jax: 0.10.0
libtpu: 0.0.40
codegen_flags: <defaults>
</compile_context>

<pallas_src>
import functools

import jax
import jax.numpy as jnp
import numpy as np
from jax.experimental import pallas as pl
from jax.experimental.pallas import tpu as pltpu


def _lstm_soft_att_decode_kernel(
    # per-step input (block indexed by t)
    x_ref,             # (1, B, E)   xt for step t
    # timestep-invariant, resident in VMEM (constant block index => fetched once)
    att_ref,           # (B*L, F)    flattened att_seq
    h0_ref, c0_ref,    # (B, H)      initial state
    wi_ref, wh_ref, wz_ref, bg_ref,   # gate weights (E,4H),(H,4H),(F,4H); bias (1,4H)=bi+bh+bz
    wa_ref, ba_ref,    # att_2_att_h (F, A), (1, A)
    wha_ref, bha_ref,  # h_2_att_h   (H, A), (1, A)
    wo_ref, bo_ref,    # att_h_2_out (1, A), (1, 1)
    # outputs
    h_out_ref,         # (1, B, H)   next_h for step t   (block indexed by t)
    c_out_ref,         # (B, H)      final next_c        (constant block, resident)
    # scratch (persists across grid steps)
    h_sc, c_sc,        # (B, H) f32  carried LSTM state
    patt_sc,           # (B*L, A) f32  hoisted att_seq @ wa + ba
    *, B, L,
):
    f32 = jnp.float32
    t = pl.program_id(0)

    @pl.when(t == 0)
    def _init():
        h_sc[...] = h0_ref[...].astype(f32)
        c_sc[...] = c0_ref[...].astype(f32)
        # Timestep-invariant attention projection: computed once, reused for
        # all T steps (largest matmul in the original per-step path).
        patt_sc[...] = (
            jnp.dot(att_ref[...].astype(f32), wa_ref[...],
                    preferred_element_type=f32)
            + ba_ref[...]
        )

    xt = x_ref[0].astype(f32)                 # (B, E)
    pre_h = h_sc[...]                         # (B, H)
    pre_c = c_sc[...]                         # (B, H)
    att2d = att_ref[...].astype(f32)          # (B*L, F)
    F_dim = att2d.shape[-1]
    H = pre_h.shape[-1]

    # ---- soft attention (per-step part only) ----
    h_lin = jnp.dot(pre_h, wha_ref[...], preferred_element_type=f32) + bha_ref[...]  # (B, A)
    # Leading-dim split only (lane dim unchanged) -> cheap reshape.
    att_h = jnp.tanh(patt_sc[...].reshape(B, L, -1) + h_lin[:, None, :])   # (B, L, A)

    # TODO(synk): score path does a lane<->sublane round trip; fine at L=16,
    # revisit (per-B segment softmax in (B*L, 1) sublane layout) if L grows.
    scores = jnp.sum(att_h * wo_ref[...][None, :, :], axis=-1) + bo_ref[0, 0]  # (B, L)
    scores = scores - jnp.max(scores, axis=-1, keepdims=True)
    exp_s = jnp.exp(scores)
    conv_weight = exp_s * pl.reciprocal(
        jnp.sum(exp_s, axis=-1, keepdims=True), approx=True
    )                                                     # (B, L)

    # Context vector z (sublane reduce over L, XLU).
    z = jnp.sum(conv_weight[:, :, None] * att2d.reshape(B, L, F_dim), axis=1)  # (B, F)

    # ---- LSTM gates: three MXU dots summed (no in-kernel lane concat) ----
    sums = (
        jnp.dot(xt, wi_ref[...], preferred_element_type=f32)
        + jnp.dot(pre_h, wh_ref[...], preferred_element_type=f32)
        + jnp.dot(z, wz_ref[...], preferred_element_type=f32)
        + bg_ref[...]
    )                                                     # (B, 4H)

    # Fused activations: one sigmoid over i|f|o, one tanh over the transform.
    sig = jax.nn.sigmoid(sums[:, : 3 * H])
    in_gate = sig[:, :H]
    forget_gate = sig[:, H:2 * H]
    out_gate = sig[:, 2 * H:3 * H]
    in_transform = jnp.tanh(sums[:, 3 * H:])

    next_c = forget_gate * pre_c + in_gate * in_transform
    next_h = out_gate * jnp.tanh(next_c)
    # TODO(synk): nn.Dropout omitted (inference / eval-mode identity).

    # Carry state; direct slice stores (no packed-lane concat).
    h_sc[...] = next_h
    c_sc[...] = next_c
    h_out_ref[0] = next_h.astype(h_out_ref.dtype)
    c_out_ref[...] = next_c.astype(c_out_ref.dtype)


def lstm_soft_attention_decode(x_seq, att_seq, state, params, *,
                               vmem_limit_bytes=None):
    """Run T LSTM-soft-attention steps in ONE pallas_call (grid over T).

    x_seq:   (T, B, E)
    att_seq: (B, L, F)     (constant across steps)
    state:   (h, c), each (1, B, H)
    returns  (h_seq (T, B, H), (next_h (1, B, H), next_c (1, B, H)))
    """
    T, B, E = x_seq.shape
    _, L, F = att_seq.shape
    pre_h = state[0][-1]
    pre_c = state[1][-1]
    H = pre_h.shape[-1]
    A = params["wa"].shape[-1]
    dtype = x_seq.dtype

    # Layout guards: weights pre-transposed to (in, out), biases (1, out).
    assert params["wi"].shape == (E, 4 * H), "wi must be (E, 4H) [transposed]"
    assert params["wh"].shape == (H, 4 * H), "wh must be (H, 4H) [transposed]"
    assert params["wz"].shape == (F, 4 * H), "wz must be (F, 4H) [transposed]"
    assert params["wa"].shape == (F, A) and params["wha"].shape == (H, A)
    assert params["wo"].shape == (1, A) and params["bo"].shape == (1, 1)

    # Wrapper-side fusion / layout plumbing (free XLA ops).
    b_gates = params["bi"] + params["bh"] + params["bz"]      # (1, 4H)
    att_flat = att_seq.reshape(B * L, F)                      # (B*L, F)

    def const(shape):
        zeros = (0,) * len(shape)
        return pl.BlockSpec(shape, lambda t: zeros)           # fetched once, resident

    in_specs = [
        pl.BlockSpec((1, B, E), lambda t: (t, 0, 0)),         # x_seq (per step)
        const((B * L, F)),                                    # att_flat
        const((B, H)), const((B, H)),                         # h0, c0
        const((E, 4 * H)), const((H, 4 * H)), const((F, 4 * H)), const((1, 4 * H)),
        const((F, A)), const((1, A)),
        const((H, A)), const((1, A)),
        const((1, A)), const((1, 1)),
    ]
    out_specs = [
        pl.BlockSpec((1, B, H), lambda t: (t, 0, 0)),         # per-step h
        pl.BlockSpec((B, H), lambda t: (0, 0)),               # final c (resident)
    ]
    out_shape = [
        jax.ShapeDtypeStruct((T, B, H), dtype),
        jax.ShapeDtypeStruct((B, H), dtype),
    ]
    scratch = [
        pltpu.VMEM((B, H), jnp.float32),       # carried h
        pltpu.VMEM((B, H), jnp.float32),       # carried c
        pltpu.VMEM((B * L, A), jnp.float32),   # hoisted att projection
    ]

    # TODO(synk): with B>=8 (or beam expansion) add a leading "parallel" batch
    #   axis (dimension_semantics=("parallel", "arbitrary")) to use both v7x
    #   TensorCores; at B=4 a serial split would be pure overhead.
    # TODO(synk): for v6e/v7x, pass weights/att_seq in bf16 (keeping
    #   preferred_element_type=f32) to halve weight DMA and match MXU dtype.
    # TODO(synk): at production H/F/L sizes, set vmem_limit_bytes explicitly
    #   (v5e scoped default is 16 MiB) or stream att_seq from HBM
    #   (memory_space=pl.ANY + emit_pipeline) to fit v7x's 64 MiB VMEM.
    h_seq, c_final = pl.pallas_call(
        functools.partial(_lstm_soft_att_decode_kernel, B=B, L=L),
        grid=(T,),
        out_shape=out_shape,
        in_specs=in_specs,
        out_specs=out_specs,
        scratch_shapes=scratch,
        compiler_params=pltpu.CompilerParams(
            dimension_semantics=("arbitrary",),   # h/c carried across steps
            vmem_limit_bytes=vmem_limit_bytes,
        ),
    )(
        x_seq, att_flat, pre_h, pre_c,
        params["wi"], params["wh"], params["wz"], b_gates,
        params["wa"], params["ba"], params["wha"], params["bha"],
        params["wo"], params["bo"],
    )
    next_h = h_seq[-1]
    return h_seq, (next_h[None], c_final[None])


def lstm_soft_attention_core(xt, att_seq, state, params):
    """Module-equivalent single-step forward (eval mode) = T=1 decode."""
    h_seq, new_state = lstm_soft_attention_decode(xt[None], att_seq, state, params)
    return h_seq[0], new_state


def _init_params(key, E, H, F, A):
    """Deterministic uniform(-0.1, 0.1) init matching the torch module shapes,
    with Linear weights pre-transposed to (in, out)."""
    initrange = 0.1
    names_shapes = [
        ("wi", (E, 4 * H)), ("bi", (1, 4 * H)),
        ("wh", (H, 4 * H)), ("bh", (1, 4 * H)),
        ("wz", (F, 4 * H)), ("bz", (1, 4 * H)),
        ("wa", (F, A)), ("ba", (1, A)),
        ("wha", (H, A)), ("bha", (1, A)),
        ("wo", (1, A)), ("bo", (1, 1)),
    ]
    params = {}
    keys = jax.random.split(key, len(names_shapes))
    for k, (name, shape) in zip(keys, names_shapes):
        params[name] = jax.random.uniform(
            k, shape, jnp.float32, minval=-initrange, maxval=initrange
        )
    return params


def _reference_step(xt, att_seq, pre_h, pre_c, params):
    """Pure-JAX reference mirroring the torch forward (eval mode)."""
    att_lin = jnp.einsum("blf,fa->bla", att_seq, params["wa"]) + params["ba"][None]
    h_lin = pre_h @ params["wha"] + params["bha"]
    att_h = jnp.tanh(att_lin + h_lin[:, None, :])
    scores = jnp.einsum("bla,a->bl", att_h, params["wo"][0]) + params["bo"][0, 0]
    conv_weight = jax.nn.softmax(scores, axis=1)
    z = jnp.einsum("blf,bl->bf", att_seq, conv_weight)
    sums = (
        xt @ params["wi"] + params["bi"]
        + pre_h @ params["wh"] + params["bh"]
        + z @ params["wz"] + params["bz"]
    )
    H = pre_h.shape[-1]
    sig = jax.nn.sigmoid(sums[:, : 3 * H])
    next_c = sig[:, H:2 * H] * pre_c + sig[:, :H] * jnp.tanh(sums[:, 3 * H:])
    next_h = sig[:, 2 * H:3 * H] * jnp.tanh(next_c)
    return next_h, next_c


if __name__ == "__main__":
    # small shapes consistent with the module
    B = 4                 # batch
    E = 32                # input_encoding_size
    H = 32                # lstm_size    (4H = 128 -> one full lane-width vreg)
    F = 64                # conv_feat_size
    L = 16                # conv_att_size
    A = 32                # att_hidden_size
    T = 8                 # decode steps for the in-kernel loop demo

    key = jax.random.PRNGKey(0)
    kp, kx, kxs, ka, kh, kc = jax.random.split(key, 6)

    params = _init_params(kp, E, H, F, A)
    xt = jax.random.normal(kx, (B, E), jnp.float32)
    x_seq = jax.random.normal(kxs, (T, B, E), jnp.float32)
    att_seq = jax.random.normal(ka, (B, L, F), jnp.float32)
    h0 = jax.random.normal(kh, (1, B, H), jnp.float32)
    c0 = jax.random.normal(kc, (1, B, H), jnp.float32)
    state = (h0, c0)

    # Tolerance relaxed from 2e-5 because of pl.reciprocal(approx=True) in the
    # softmax denominator (EUP approx reciprocal).
    TOL = dict(atol=2e-3, rtol=2e-3)

    # --- module-equivalent single-step forward ---
    fwd = jax.jit(lstm_soft_attention_core)
    output, (next_h, next_c) = fwd(xt, att_seq, state, params)
    jax.block_until_ready((output, next_h, next_c))
    ref_h, ref_c = _reference_step(xt, att_seq, h0[-1], c0[-1], params)
    np.testing.assert_allclose(np.asarray(output), np.asarray(ref_h), **TOL)
    np.testing.assert_allclose(np.asarray(next_h[0]), np.asarray(ref_h), **TOL)
    np.testing.assert_allclose(np.asarray(next_c[0]), np.asarray(ref_c), **TOL)

    # --- multi-step decode: T steps in one pallas_call ---
    decode = jax.jit(lstm_soft_attention_decode)
    h_seq, (hT, cT) = decode(x_seq, att_seq, state, params)
    jax.block_until_ready((h_seq, hT, cT))

    rh, rc = h0[-1], c0[-1]
    ref_hs = []
    for t in range(T):
        rh, rc = _reference_step(x_seq[t], att_seq, rh, rc, params)
        ref_hs.append(rh)
    ref_hs = jnp.stack(ref_hs)
    np.testing.assert_allclose(np.asarray(h_seq), np.asarray(ref_hs), **TOL)
    np.testing.assert_allclose(np.asarray(hT[0]), np.asarray(rh), **TOL)
    np.testing.assert_allclose(np.asarray(cT[0]), np.asarray(rc), **TOL)

    print("KERNEL_OK")
</pallas_src>

<mosaic_0001>
module attributes {stable_mosaic.version = 11 : i64} {
  func.func @_lstm_soft_att_decode_kernel(%arg0: i32, %arg1: memref<1x4x32xf32, #tpu.memory_space<vmem>>, %arg2: memref<64x64xf32, #tpu.memory_space<vmem>>, %arg3: memref<4x32xf32, #tpu.memory_space<vmem>>, %arg4: memref<4x32xf32, #tpu.memory_space<vmem>>, %arg5: memref<32x128xf32, #tpu.memory_space<vmem>>, %arg6: memref<32x128xf32, #tpu.memory_space<vmem>>, %arg7: memref<64x128xf32, #tpu.memory_space<vmem>>, %arg8: memref<1x128xf32, #tpu.memory_space<vmem>>, %arg9: memref<64x32xf32, #tpu.memory_space<vmem>>, %arg10: memref<1x32xf32, #tpu.memory_space<vmem>>, %arg11: memref<32x32xf32, #tpu.memory_space<vmem>>, %arg12: memref<1x32xf32, #tpu.memory_space<vmem>>, %arg13: memref<1x32xf32, #tpu.memory_space<vmem>>, %arg14: memref<1x1xf32, #tpu.memory_space<vmem>>, %arg15: memref<1x4x32xf32, #tpu.memory_space<vmem>>, %arg16: memref<4x32xf32, #tpu.memory_space<vmem>>, %arg17: memref<4x32xf32, #tpu.memory_space<vmem>>, %arg18: memref<4x32xf32, #tpu.memory_space<vmem>>, %arg19: memref<64x32xf32, #tpu.memory_space<vmem>>) attributes {dimension_semantics = [#tpu.dimension_semantics<arbitrary>], iteration_bounds = array<i64: 1>, scalar_prefetch = 0 : i64, scratch_operands = 3 : i64, tpu.core_type = #tpu.core_type<tc>, window_params = [{transform_indices = @transform_0, window_bounds = array<i64: 1, 4, 32>}, {pipeline_mode = #tpu.pipeline_mode<synchronous>, transform_indices = @transform_1, window_bounds = array<i64: 64, 64>}, {pipeline_mode = #tpu.pipeline_mode<synchronous>, transform_indices = @transform_2, window_bounds = array<i64: 4, 32>}, {pipeline_mode = #tpu.pipeline_mode<synchronous>, transform_indices = @transform_3, window_bounds = array<i64: 4, 32>}, {pipeline_mode = #tpu.pipeline_mode<synchronous>, transform_indices = @transform_4, window_bounds = array<i64: 32, 128>}, {pipeline_mode = #tpu.pipeline_mode<synchronous>, transform_indices = @transform_5, window_bounds = array<i64: 32, 128>}, {pipeline_mode = #tpu.pipeline_mode<synchronous>, transform_indices = @transform_6, window_bounds = array<i64: 64, 128>}, {pipeline_mode = #tpu.pipeline_mode<synchronous>, transform_indices = @transform_7, window_bounds = array<i64: 1, 128>}, {pipeline_mode = #tpu.pipeline_mode<synchronous>, transform_indices = @transform_8, window_bounds = array<i64: 64, 32>}, {pipeline_mode = #tpu.pipeline_mode<synchronous>, transform_indices = @transform_9, window_bounds = array<i64: 1, 32>}, {pipeline_mode = #tpu.pipeline_mode<synchronous>, transform_indices = @transform_10, window_bounds = array<i64: 32, 32>}, {pipeline_mode = #tpu.pipeline_mode<synchronous>, transform_indices = @transform_11, window_bounds = array<i64: 1, 32>}, {pipeline_mode = #tpu.pipeline_mode<synchronous>, transform_indices = @transform_12, window_bounds = array<i64: 1, 32>}, {pipeline_mode = #tpu.pipeline_mode<synchronous>, transform_indices = @transform_13, window_bounds = array<i64: 1, 1>}, {transform_indices = @transform_14, window_bounds = array<i64: 1, 4, 32>}, {pipeline_mode = #tpu.pipeline_mode<synchronous>, transform_indices = @transform_15, window_bounds = array<i64: 4, 32>}]} {
    %c0_i32 = arith.constant 0 : i32
    %0 = arith.cmpi eq, %arg0, %c0_i32 : i32
    %1 = arith.extui %0 : i1 to i32
    %c0_i32_0 = arith.constant 0 : i32
    %2 = arith.cmpi ne, %1, %c0_i32_0 : i32
    scf.if %2 {
      %c0_44 = arith.constant 0 : index
      %c0_45 = arith.constant 0 : index
      %76 = vector.load %arg3[%c0_44, %c0_45] : memref<4x32xf32, #tpu.memory_space<vmem>>, vector<4x32xf32>
      %c0_46 = arith.constant 0 : index
      %c0_47 = arith.constant 0 : index
      %77 = vector.load %arg17[%c0_46, %c0_47] : memref<4x32xf32, #tpu.memory_space<vmem>>, vector<4x32xf32>
      tpu.vector_store %arg17[%c0_46, %c0_47], %76 {strides = array<i32>} : memref<4x32xf32, #tpu.memory_space<vmem>>, vector<4x32xf32>,
      %c0_48 = arith.constant 0 : index
      %c0_49 = arith.constant 0 : index
      %78 = vector.load %arg4[%c0_48, %c0_49] : memref<4x32xf32, #tpu.memory_space<vmem>>, vector<4x32xf32>
      %c0_50 = arith.constant 0 : index
      %c0_51 = arith.constant 0 : index
      %79 = vector.load %arg18[%c0_50, %c0_51] : memref<4x32xf32, #tpu.memory_space<vmem>>, vector<4x32xf32>
      tpu.vector_store %arg18[%c0_50, %c0_51], %78 {strides = array<i32>} : memref<4x32xf32, #tpu.memory_space<vmem>>, vector<4x32xf32>,
      %c0_52 = arith.constant 0 : index
      %c0_53 = arith.constant 0 : index
      %80 = vector.load %arg2[%c0_52, %c0_53] : memref<64x64xf32, #tpu.memory_space<vmem>>, vector<64x64xf32>
      %c0_54 = arith.constant 0 : index
      %c0_55 = arith.constant 0 : index
      %81 = vector.load %arg9[%c0_54, %c0_55] : memref<64x32xf32, #tpu.memory_space<vmem>>, vector<64x32xf32>
      %cst_56 = arith.constant dense<0.000000e+00> : vector<64x32xf32>
      %82 = tpu.matmul %80, %81, %cst_56 {dimension_numbers = #tpu.dot_dimension_numbers<[1], [0], [0], [1], [0, 0, 1, 1], [], []>} : vector<64x64xf32>, vector<64x32xf32>, vector<64x32xf32> -> vector<64x32xf32>
      %c0_57 = arith.constant 0 : index
      %c0_58 = arith.constant 0 : index
      %83 = vector.load %arg10[%c0_57, %c0_58] : memref<1x32xf32, #tpu.memory_space<vmem>>, vector<1x32xf32>
      %84 = vector.broadcast %83 : vector<1x32xf32> to vector<64x32xf32>
      %85 = arith.addf %82, %84 : vector<64x32xf32>
      %c0_59 = arith.constant 0 : index
      %c0_60 = arith.constant 0 : index
      %86 = vector.load %arg19[%c0_59, %c0_60] : memref<64x32xf32, #tpu.memory_space<vmem>>, vector<64x32xf32>
      tpu.vector_store %arg19[%c0_59, %c0_60], %85 {strides = array<i32>} : memref<64x32xf32, #tpu.memory_space<vmem>>, vector<64x32xf32>,
    } else {
    }
    %c0 = arith.constant 0 : index
    %c0_1 = arith.constant 0 : index
    %c0_2 = arith.constant 0 : index
    %3 = vector.load %arg1[%c0, %c0_1, %c0_2] : memref<1x4x32xf32, #tpu.memory_space<vmem>>, vector<1x4x32xf32>
    %4 = vector.shape_cast %3 : vector<1x4x32xf32> to vector<4x32xf32>
    %c0_3 = arith.constant 0 : index
    %c0_4 = arith.constant 0 : index
    %5 = vector.load %arg17[%c0_3, %c0_4] : memref<4x32xf32, #tpu.memory_space<vmem>>, vector<4x32xf32>
    %c0_5 = arith.constant 0 : index
    %c0_6 = arith.constant 0 : index
    %6 = vector.load %arg18[%c0_5, %c0_6] : memref<4x32xf32, #tpu.memory_space<vmem>>, vector<4x32xf32>
    %c0_7 = arith.constant 0 : index
    %c0_8 = arith.constant 0 : index
    %7 = vector.load %arg2[%c0_7, %c0_8] : memref<64x64xf32, #tpu.memory_space<vmem>>, vector<64x64xf32>
    %c0_9 = arith.constant 0 : index
    %c0_10 = arith.constant 0 : index
    %8 = vector.load %arg11[%c0_9, %c0_10] : memref<32x32xf32, #tpu.memory_space<vmem>>, vector<32x32xf32>
    %cst = arith.constant dense<0.000000e+00> : vector<4x32xf32>
    %9 = tpu.matmul %5, %8, %cst {dimension_numbers = #tpu.dot_dimension_numbers<[1], [0], [0], [1], [0, 0, 1, 1], [], []>} : vector<4x32xf32>, vector<32x32xf32>, vector<4x32xf32> -> vector<4x32xf32>
    %c0_11 = arith.constant 0 : index
    %c0_12 = arith.constant 0 : index
    %10 = vector.load %arg12[%c0_11, %c0_12] : memref<1x32xf32, #tpu.memory_space<vmem>>, vector<1x32xf32>
    %11 = vector.broadcast %10 : vector<1x32xf32> to vector<4x32xf32>
    %12 = arith.addf %9, %11 : vector<4x32xf32>
    %c0_13 = arith.constant 0 : index
    %c0_14 = arith.constant 0 : index
    %13 = vector.load %arg19[%c0_13, %c0_14] : memref<64x32xf32, #tpu.memory_space<vmem>>, vector<64x32xf32>
    %14 = vector.shape_cast %13 : vector<64x32xf32> to vector<4x16x32xf32>
    %15 = vector.shape_cast %12 : vector<4x32xf32> to vector<4x1x32xf32>
    %16 = vector.broadcast %15 : vector<4x1x32xf32> to vector<4x16x32xf32>
    %17 = arith.addf %14, %16 : vector<4x16x32xf32>
    %18 = math.tanh %17 : vector<4x16x32xf32>
    %c0_15 = arith.constant 0 : index
    %c0_16 = arith.constant 0 : index
    %19 = vector.load %arg13[%c0_15, %c0_16] : memref<1x32xf32, #tpu.memory_space<vmem>>, vector<1x32xf32>
    %20 = vector.shape_cast %19 : vector<1x32xf32> to vector<1x1x32xf32>
    %21 = vector.broadcast %20 : vector<1x1x32xf32> to vector<4x16x32xf32>
    %22 = arith.mulf %18, %21 : vector<4x16x32xf32>
    %cst_17 = arith.constant dense<0.000000e+00> : vector<4x16xf32>
    %23 = vector.multi_reduction <add>, %22, %cst_17 [2] : vector<4x16x32xf32> to vector<4x16xf32>
    %c0_18 = arith.constant 0 : index
    %c0_19 = arith.constant 0 : index
    %24 = vector.load %arg14[%c0_18, %c0_19] : memref<1x1xf32, #tpu.memory_space<vmem>>, vector<1x1xf32>
    %25 = vector.extract %24[0, 0] : f32 from vector<1x1xf32>
    %26 = vector.broadcast %25 : f32 to vector<4x16xf32>
    %27 = arith.addf %23, %26 : vector<4x16xf32>
    %cst_20 = arith.constant dense<0xFF800000> : vector<4xf32>
    %28 = vector.multi_reduction <maximumf>, %27, %cst_20 [1] : vector<4x16xf32> to vector<4xf32>
    %29 = vector.shape_cast %28 : vector<4xf32> to vector<4x1xf32>
    %30 = vector.broadcast %29 : vector<4x1xf32> to vector<4x16xf32>
    %31 = arith.subf %27, %30 : vector<4x16xf32>
    %32 = math.exp %31 : vector<4x16xf32>
    %cst_21 = arith.constant dense<0.000000e+00> : vector<4xf32>
    %33 = vector.multi_reduction <add>, %32, %cst_21 [1] : vector<4x16xf32> to vector<4xf32>
    %34 = vector.shape_cast %33 : vector<4xf32> to vector<4x1xf32>
    %35 = tpu.reciprocal %34 {approx = true} : vector<4x1xf32> -> vector<4x1xf32>
    %36 = vector.broadcast %35 : vector<4x1xf32> to vector<4x16xf32>
    %37 = arith.mulf %32, %36 : vector<4x16xf32>
    %38 = vector.shape_cast %37 : vector<4x16xf32> to vector<4x16x1xf32>
    %39 = vector.shape_cast %7 : vector<64x64xf32> to vector<4x16x64xf32>
    %40 = vector.broadcast %38 : vector<4x16x1xf32> to vector<4x16x64xf32>
    %41 = arith.mulf %40, %39 : vector<4x16x64xf32>
    %cst_22 = arith.constant dense<0.000000e+00> : vector<4x64xf32>
    %42 = vector.multi_reduction <add>, %41, %cst_22 [1] : vector<4x16x64xf32> to vector<4x64xf32>
    %c0_23 = arith.constant 0 : index
    %c0_24 = arith.constant 0 : index
    %43 = vector.load %arg5[%c0_23, %c0_24] : memref<32x128xf32, #tpu.memory_space<vmem>>, vector<32x128xf32>
    %cst_25 = arith.constant dense<0.000000e+00> : vector<4x128xf32>
    %44 = tpu.matmul %4, %43, %cst_25 {dimension_numbers = #tpu.dot_dimension_numbers<[1], [0], [0], [1], [0, 0, 1, 1], [], []>} : vector<4x32xf32>, vector<32x128xf32>, vector<4x128xf32> -> vector<4x128xf32>
    %c0_26 = arith.constant 0 : index
    %c0_27 = arith.constant 0 : index
    %45 = vector.load %arg6[%c0_26, %c0_27] : memref<32x128xf32, #tpu.memory_space<vmem>>, vector<32x128xf32>
    %cst_28 = arith.constant dense<0.000000e+00> : vector<4x128xf32>
    %46 = tpu.matmul %5, %45, %cst_28 {dimension_numbers = #tpu.dot_dimension_numbers<[1], [0], [0], [1], [0, 0, 1, 1], [], []>} : vector<4x32xf32>, vector<32x128xf32>, vector<4x128xf32> -> vector<4x128xf32>
    %47 = arith.addf %44, %46 : vector<4x128xf32>
    %c0_29 = arith.constant 0 : index
    %c0_30 = arith.constant 0 : index
    %48 = vector.load %arg7[%c0_29, %c0_30] : memref<64x128xf32, #tpu.memory_space<vmem>>, vector<64x128xf32>
    %cst_31 = arith.constant dense<0.000000e+00> : vector<4x128xf32>
    %49 = tpu.matmul %42, %48, %cst_31 {dimension_numbers = #tpu.dot_dimension_numbers<[1], [0], [0], [1], [0, 0, 1, 1], [], []>} : vector<4x64xf32>, vector<64x128xf32>, vector<4x128xf32> -> vector<4x128xf32>
    %50 = arith.addf %47, %49 : vector<4x128xf32>
    %c0_32 = arith.constant 0 : index
    %c0_33 = arith.constant 0 : index
    %51 = vector.load %arg8[%c0_32, %c0_33] : memref<1x128xf32, #tpu.memory_space<vmem>>, vector<1x128xf32>
    %52 = vector.broadcast %51 : vector<1x128xf32> to vector<4x128xf32>
    %53 = arith.addf %50, %52 : vector<4x128xf32>
    %54 = vector.extract_strided_slice %53 {offsets = [0, 0], sizes = [4, 96], strides = [1, 1]} : vector<4x128xf32> to vector<4x96xf32>
    %55 = arith.negf %54 : vector<4x96xf32>
    %56 = math.exp %55 : vector<4x96xf32>
    %cst_34 = arith.constant 1.000000e+00 : f32
    %57 = vector.broadcast %cst_34 : f32 to vector<4x96xf32>
    %58 = arith.addf %57, %56 : vector<4x96xf32>
    %59 = arith.divf %57, %58 : vector<4x96xf32>
    %60 = vector.extract_strided_slice %59 {offsets = [0, 0], sizes = [4, 32], strides = [1, 1]} : vector<4x96xf32> to vector<4x32xf32>
    %61 = vector.extract_strided_slice %59 {offsets = [0, 32], sizes = [4, 32], strides = [1, 1]} : vector<4x96xf32> to vector<4x32xf32>
    %62 = vector.extract_strided_slice %59 {offsets = [0, 64], sizes = [4, 32], strides = [1, 1]} : vector<4x96xf32> to vector<4x32xf32>
    %63 = vector.extract_strided_slice %53 {offsets = [0, 96], sizes = [4, 32], strides = [1, 1]} : vector<4x128xf32> to vector<4x32xf32>
    %64 = math.tanh %63 : vector<4x32xf32>
    %65 = arith.mulf %61, %6 : vector<4x32xf32>
    %66 = arith.mulf %60, %64 : vector<4x32xf32>
    %67 = arith.addf %65, %66 : vector<4x32xf32>
    %68 = math.tanh %67 : vector<4x32xf32>
    %69 = arith.mulf %62, %68 : vector<4x32xf32>
    %c0_35 = arith.constant 0 : index
    %c0_36 = arith.constant 0 : index
    %70 = vector.load %arg17[%c0_35, %c0_36] : memref<4x32xf32, #tpu.memory_space<vmem>>, vector<4x32xf32>
    tpu.vector_store %arg17[%c0_35, %c0_36], %69 {strides = array<i32>} : memref<4x32xf32, #tpu.memory_space<vmem>>, vector<4x32xf32>,
    %c0_37 = arith.constant 0 : index
    %c0_38 = arith.constant 0 : index
    %71 = vector.load %arg18[%c0_37, %c0_38] : memref<4x32xf32, #tpu.memory_space<vmem>>, vector<4x32xf32>
    tpu.vector_store %arg18[%c0_37, %c0_38], %67 {strides = array<i32>} : memref<4x32xf32, #tpu.memory_space<vmem>>, vector<4x32xf32>,
    %c0_39 = arith.constant 0 : index
    %c0_40 = arith.constant 0 : index
    %c0_41 = arith.constant 0 : index
    %72 = vector.load %arg15[%c0_39, %c0_40, %c0_41] : memref<1x4x32xf32, #tpu.memory_space<vmem>>, vector<1x4x32xf32>
    %73 = vector.shape_cast %72 : vector<1x4x32xf32> to vector<4x32xf32>
    %74 = vector.shape_cast %69 : vector<4x32xf32> to vector<1x4x32xf32>
    tpu.vector_store %arg15[%c0_39, %c0_40, %c0_41], %74 {strides = array<i32>} : memref<1x4x32xf32, #tpu.memory_space<vmem>>, vector<1x4x32xf32>,
    %c0_42 = arith.constant 0 : index
    %c0_43 = arith.constant 0 : index
    %75 = vector.load %arg16[%c0_42, %c0_43] : memref<4x32xf32, #tpu.memory_space<vmem>>, vector<4x32xf32>
    tpu.vector_store %arg16[%c0_42, %c0_43], %67 {strides = array<i32>} : memref<4x32xf32, #tpu.memory_space<vmem>>, vector<4x32xf32>,
    return
  }
  func.func @transform_0(%arg0: i32) -> (i32, i32, i32) {
    %c0_i32 = arith.constant 0 : i32
    %c0_i32_0 = arith.constant 0 : i32
    %c0_i32_1 = arith.constant 0 : i32
    return %arg0, %c0_i32, %c0_i32_0 : i32, i32, i32
  }
  func.func @transform_1(%arg0: i32) -> (i32, i32) {
    %c0_i32 = arith.constant 0 : i32
    %c0_i32_0 = arith.constant 0 : i32
    %c0_i32_1 = arith.constant 0 : i32
    return %c0_i32, %c0_i32_0 : i32, i32
  }
  func.func @transform_2(%arg0: i32) -> (i32, i32) {
    %c0_i32 = arith.constant 0 : i32
    %c0_i32_0 = arith.constant 0 : i32
    %c0_i32_1 = arith.constant 0 : i32
    return %c0_i32, %c0_i32_0 : i32, i32
  }
  func.func @transform_3(%arg0: i32) -> (i32, i32) {
    %c0_i32 = arith.constant 0 : i32
    %c0_i32_0 = arith.constant 0 : i32
    %c0_i32_1 = arith.constant 0 : i32
    return %c0_i32, %c0_i32_0 : i32, i32
  }
  func.func @transform_4(%arg0: i32) -> (i32, i32) {
    %c0_i32 = arith.constant 0 : i32
    %c0_i32_0 = arith.constant 0 : i32
    %c0_i32_1 = arith.constant 0 : i32
    return %c0_i32, %c0_i32_0 : i32, i32
  }
  func.func @transform_5(%arg0: i32) -> (i32, i32) {
    %c0_i32 = arith.constant 0 : i32
    %c0_i32_0 = arith.constant 0 : i32
    %c0_i32_1 = arith.constant 0 : i32
    return %c0_i32, %c0_i32_0 : i32, i32
  }
  func.func @transform_6(%arg0: i32) -> (i32, i32) {
    %c0_i32 = arith.constant 0 : i32
    %c0_i32_0 = arith.constant 0 : i32
    %c0_i32_1 = arith.constant 0 : i32
    return %c0_i32, %c0_i32_0 : i32, i32
  }
  func.func @transform_7(%arg0: i32) -> (i32, i32) {
    %c0_i32 = arith.constant 0 : i32
    %c0_i32_0 = arith.constant 0 : i32
    %c0_i32_1 = arith.constant 0 : i32
    return %c0_i32, %c0_i32_0 : i32, i32
  }
  func.func @transform_8(%arg0: i32) -> (i32, i32) {
    %c0_i32 = arith.constant 0 : i32
    %c0_i32_0 = arith.constant 0 : i32
    %c0_i32_1 = arith.constant 0 : i32
    return %c0_i32, %c0_i32_0 : i32, i32
  }
  func.func @transform_9(%arg0: i32) -> (i32, i32) {
    %c0_i32 = arith.constant 0 : i32
    %c0_i32_0 = arith.constant 0 : i32
    %c0_i32_1 = arith.constant 0 : i32
    return %c0_i32, %c0_i32_0 : i32, i32
  }
  func.func @transform_10(%arg0: i32) -> (i32, i32) {
    %c0_i32 = arith.constant 0 : i32
    %c0_i32_0 = arith.constant 0 : i32
    %c0_i32_1 = arith.constant 0 : i32
    return %c0_i32, %c0_i32_0 : i32, i32
  }
  func.func @transform_11(%arg0: i32) -> (i32, i32) {
    %c0_i32 = arith.constant 0 : i32
    %c0_i32_0 = arith.constant 0 : i32
    %c0_i32_1 = arith.constant 0 : i32
    return %c0_i32, %c0_i32_0 : i32, i32
  }
  func.func @transform_12(%arg0: i32) -> (i32, i32) {
    %c0_i32 = arith.constant 0 : i32
    %c0_i32_0 = arith.constant 0 : i32
    %c0_i32_1 = arith.constant 0 : i32
    return %c0_i32, %c0_i32_0 : i32, i32
  }
  func.func @transform_13(%arg0: i32) -> (i32, i32) {
    %c0_i32 = arith.constant 0 : i32
    %c0_i32_0 = arith.constant 0 : i32
    %c0_i32_1 = arith.constant 0 : i32
    return %c0_i32, %c0_i32_0 : i32, i32
  }
  func.func @transform_14(%arg0: i32) -> (i32, i32, i32) {
    %c0_i32 = arith.constant 0 : i32
    %c0_i32_0 = arith.constant 0 : i32
    %c0_i32_1 = arith.constant 0 : i32
    return %arg0, %c0_i32, %c0_i32_0 : i32, i32, i32
  }
  func.func @transform_15(%arg0: i32) -> (i32, i32) {
    %c0_i32 = arith.constant 0 : i32
    %c0_i32_0 = arith.constant 0 : i32
    %c0_i32_1 = arith.constant 0 : i32
    return %c0_i32, %c0_i32_0 : i32, i32
  }
}

</mosaic_0001>

<llo_original>
// kernel: lstm_soft_attention_core.1
$region0: #{lstm_soft_attention_core.1}
  #allocation0 [shape = 'u32[]', space=smem, size = 0x4, offset = 0x4, fixed_abs, tag = 'smem constant byte address 0x4 - core index']
  #allocation1 [shape = 'u32[72,128]{1,0:T(1,128)}', space=vmem, size = 0x9000, scoped, tag = 'internal scratch']
  #allocation2 [shape = 'f32[4,32]{1,0:T(4,128)}', space=vmem, size = 0x800, scoped, tag = 'scratch operand']
  #allocation3 [shape = 'f32[4,32]{1,0:T(4,128)}', space=vmem, size = 0x800, scoped, tag = 'scratch operand']
  #allocation4 [shape = 'f32[64,32]{1,0:T(8,128)}', space=vmem, size = 0x8000, scoped, tag = 'scratch operand']
  #allocation5 [shape = 'f32[1,1]{1,0:T(1,128)S(1)}', space=vmem, size = 0x200, scoped, tag = 'scoped memory for lstm_soft_attention_core.1']
  %s0 = inlined_call_operand.vmem [shape: f32[1,4,32], index: 0, kind: input, shape index: {}]
  %s1 = inlined_call_operand.vmem [shape: f32[64,64], index: 1, kind: input, shape index: {}]
  %s2 = inlined_call_operand.vmem [shape: f32[4,32], index: 2, kind: input, shape index: {}]
  %s3 = inlined_call_operand.hbm [shape: f32[4,32], index: 3, kind: input, shape index: {}]
  %s4 = inlined_call_operand.vmem [shape: f32[32,128], index: 4, kind: input, shape index: {}]
  %s5 = inlined_call_operand.hbm [shape: f32[32,128], index: 5, kind: input, shape index: {}]
  %s6 = inlined_call_operand.hbm [shape: f32[64,128], index: 6, kind: input, shape index: {}]
  %s7 = inlined_call_operand.vmem [shape: f32[1,128], index: 7, kind: input, shape index: {}]
  %s8 = inlined_call_operand.vmem [shape: f32[64,32], index: 8, kind: input, shape index: {}]
  %s9 = inlined_call_operand.vmem [shape: f32[1,32], index: 9, kind: input, shape index: {}]
  %s10 = inlined_call_operand.hbm [shape: f32[32,32], index: 10, kind: input, shape index: {}]
  %s11 = inlined_call_operand.vmem [shape: f32[1,32], index: 11, kind: input, shape index: {}]
  %s12 = inlined_call_operand.vmem [shape: f32[1,32], index: 12, kind: input, shape index: {}]
  %s13 = inlined_call_operand.<no memory space> [shape: f32[1,1], index: 13, kind: input, shape index: {}]
  %s14 = inlined_call_operand.vmem [shape: f32[1,4,32], index: 14, kind: output, shape index: {0}]
  %s15 = inlined_call_operand.hbm [shape: f32[4,32], index: 15, kind: output, shape index: {1}]
  %16 = xla_tuple %s14, %s15
  %s17 = sld [smem:[#allocation0]]
  $region94: #{lstm_soft_attention_core.1} parent=0
    _
  %s19 = ssub.s32 1, %s17
  %s20 = scalar_select 0, %s19, %s17
  %v21 = vstv %s13
  %22 = vst [vmem:[#allocation5] sm:$0x1] %v21
  $region1: #{lstm_soft_attention_core.1} parent=0
    #allocation6 [shape = 'u8[2048]{0}', space=vmem, size = 0x800, scoped, tag = 'input window, operand 3, single buffered']
    #allocation7 [shape = 's32[1]{0}', space=sflag, size = 0x4, scoped, tag = 'scoped memory for lstm_soft_attention_core.1']
    #allocation8 [shape = 's32[1]{0}', space=sflag, size = 0x4, scoped, tag = 'scoped memory for lstm_soft_attention_core.1']
    #allocation9 [shape = 'u8[16384]{0}', space=vmem, size = 0x4000, scoped, tag = 'input window, operand 5, single buffered']
    #allocation10 [shape = 's32[1]{0}', space=sflag, size = 0x4, scoped, tag = 'scoped memory for lstm_soft_attention_core.1']
    #allocation11 [shape = 'u8[32768]{0}', space=vmem, size = 0x8000, scoped, tag = 'input window, operand 6, single buffered']
    #allocation12 [shape = 'u8[16384]{0}', space=vmem, size = 0x4000, scoped, tag = 'input window, operand 10, single buffered']
    #allocation13 [shape = 's32[1]{0}', space=sflag, size = 0x4, scoped, tag = 'scoped memory for lstm_soft_attention_core.1']
    #allocation14 [shape = 'u8[2048]{0}', space=vmem, size = 0x800, scoped, tag = 'output window, operand 1, single buffered']
    %23 = vsyncpa [#allocation7], 0
    %24 = vsyncpa [#allocation10], 0
    %25 = vsyncpa [#allocation13], 0
    %26 = vsyncpa [#allocation8], 0
    // Predicated region
    $region2: #{lstm_soft_attention_core.1} parent=1 // pred_check
      _
    $region3: #{lstm_soft_attention_core.1} parent=1 // pred_check_branch
      %28 = sbr.rel (0) target = $region5
    $region4: #{lstm_soft_attention_core.1} parent=1 // pred_region
      _
    $region5: #{lstm_soft_attention_core.1} parent=1 // pred_fallthru
      _
    // Predicated region
    $region6: #{lstm_soft_attention_core.1} parent=1 // pred_check
      _
    $region7: #{lstm_soft_attention_core.1} parent=1 // pred_check_branch
      %30 = sbr.rel (0) target = $region9
    $region8: #{lstm_soft_attention_core.1} parent=1 // pred_region
      _
    $region9: #{lstm_soft_attention_core.1} parent=1 // pred_fallthru
      _
    // Predicated region
    $region10: #{lstm_soft_attention_core.1} parent=1 // pred_check
      _
    $region11: #{lstm_soft_attention_core.1} parent=1 // pred_check_branch
      %32 = sbr.rel (0) target = $region13
    $region12: #{lstm_soft_attention_core.1} parent=1 // pred_region
      _
    $region13: #{lstm_soft_attention_core.1} parent=1 // pred_fallthru
      _
    // Predicated region
    $region14: #{lstm_soft_attention_core.1} parent=1 // pred_check
      _
    $region15: #{lstm_soft_attention_core.1} parent=1 // pred_check_branch
      %34 = sbr.rel (0) target = $region17
    $region16: #{lstm_soft_attention_core.1} parent=1 // pred_region
      %36 = vsyncadd [#allocation7], 0
      %s38 = sshll.u32 %s3, 4
      %s39 = int_to_ptr.hbm [resolvable:$true] %s38
      %s40 = sshll.u32 [#allocation6], 4
      %s41 = int_to_ptr.vmem [resolvable:$true] %s40
      %43 = dma.hbm_to_vmem [thread:$0]  %s39, 64, %s41, [#allocation7]
    $region17: #{lstm_soft_attention_core.1} parent=1 // pred_fallthru
      _
    // Predicated region
    $region18: #{lstm_soft_attention_core.1} parent=1 // pred_check
      _
    $region19: #{lstm_soft_attention_core.1} parent=1 // pred_check_branch
      %45 = sbr.rel (0) target = $region21
    $region20: #{lstm_soft_attention_core.1} parent=1 // pred_region
      _
    $region21: #{lstm_soft_attention_core.1} parent=1 // pred_fallthru
      _
    // Predicated region
    $region22: #{lstm_soft_attention_core.1} parent=1 // pred_check
      _
    $region23: #{lstm_soft_attention_core.1} parent=1 // pred_check_branch
      %47 = sbr.rel (0) target = $region25
    $region24: #{lstm_soft_attention_core.1} parent=1 // pred_region
      %49 = vsyncadd [#allocation10], 0
      %s50 = sshll.u32 %s5, 4
      %s51 = int_to_ptr.hbm [resolvable:$true] %s50
      %s52 = sshll.u32 [#allocation9], 4
      %s53 = int_to_ptr.vmem [resolvable:$true] %s52
      %58 = dma.hbm_to_vmem [thread:$0]  %s51, 512, %s53, [#allocation10], 128, 128, 8
    $region25: #{lstm_soft_attention_core.1} parent=1 // pred_fallthru
      _
    // Predicated region
    $region26: #{lstm_soft_attention_core.1} parent=1 // pred_check
      _
    $region27: #{lstm_soft_attention_core.1} parent=1 // pred_check_branch
      %60 = sbr.rel (0) target = $region29
    $region28: #{lstm_soft_attention_core.1} parent=1 // pred_region
      %62 = vsyncadd [#allocation10], 0
      %s63 = sshll.u32 %s6, 4
      %s64 = int_to_ptr.hbm [resolvable:$true] %s63
      %s65 = sshll.u32 [#allocation11], 4
      %s66 = int_to_ptr.vmem [resolvable:$true] %s65
      %71 = dma.hbm_to_vmem [thread:$0]  %s64, 1024, %s66, [#allocation10], 128, 128, 8
    $region29: #{lstm_soft_attention_core.1} parent=1 // pred_fallthru
      _
    // Predicated region
    $region30: #{lstm_soft_attention_core.1} parent=1 // pred_check
      _
    $region31: #{lstm_soft_attention_core.1} parent=1 // pred_check_branch
      %73 = sbr.rel (0) target = $region33
    $region32: #{lstm_soft_attention_core.1} parent=1 // pred_region
      _
    $region33: #{lstm_soft_attention_core.1} parent=1 // pred_fallthru
      _
    // Predicated region
    $region34: #{lstm_soft_attention_core.1} parent=1 // pred_check
      _
    $region35: #{lstm_soft_attention_core.1} parent=1 // pred_check_branch
      %75 = sbr.rel (0) target = $region37
    $region36: #{lstm_soft_attention_core.1} parent=1 // pred_region
      _
    $region37: #{lstm_soft_attention_core.1} parent=1 // pred_fallthru
      _
    // Predicated region
    $region38: #{lstm_soft_attention_core.1} parent=1 // pred_check
      _
    $region39: #{lstm_soft_attention_core.1} parent=1 // pred_check_branch
      %77 = sbr.rel (0) target = $region41
    $region40: #{lstm_soft_attention_core.1} parent=1 // pred_region
      _
    $region41: #{lstm_soft_attention_core.1} parent=1 // pred_fallthru
      _
    // Predicated region
    $region42: #{lstm_soft_attention_core.1} parent=1 // pred_check
      _
    $region43: #{lstm_soft_attention_core.1} parent=1 // pred_check_branch
      %79 = sbr.rel (0) target = $region45
    $region44: #{lstm_soft_attention_core.1} parent=1 // pred_region
      %81 = vsyncadd [#allocation13], 0
      %s82 = sshll.u32 %s10, 4
      %s83 = int_to_ptr.hbm [resolvable:$true] %s82
      %s84 = sshll.u32 [#allocation12], 4
      %s85 = int_to_ptr.vmem [resolvable:$true] %s84
      %90 = dma.hbm_to_vmem [thread:$0]  %s83, 512, %s85, [#allocation13], 128, 128, 8
    $region45: #{lstm_soft_attention_core.1} parent=1 // pred_fallthru
      _
    // Predicated region
    $region46: #{lstm_soft_attention_core.1} parent=1 // pred_check
      _
    $region47: #{lstm_soft_attention_core.1} parent=1 // pred_check_branch
      %92 = sbr.rel (0) target = $region49
    $region48: #{lstm_soft_attention_core.1} parent=1 // pred_region
      _
    $region49: #{lstm_soft_attention_core.1} parent=1 // pred_fallthru
      _
    // Predicated region
    $region50: #{lstm_soft_attention_core.1} parent=1 // pred_check
      _
    $region51: #{lstm_soft_attention_core.1} parent=1 // pred_check_branch
      %94 = sbr.rel (0) target = $region53
    $region52: #{lstm_soft_attention_core.1} parent=1 // pred_region
      _
    $region53: #{lstm_soft_attention_core.1} parent=1 // pred_fallthru
      _
    // Predicated region
    $region54: #{lstm_soft_attention_core.1} parent=1 // pred_check
      _
    $region55: #{lstm_soft_attention_core.1} parent=1 // pred_check_branch
      %96 = sbr.rel (0) target = $region57
    $region56: #{lstm_soft_attention_core.1} parent=1 // pred_region
      _
    $region57: #{lstm_soft_attention_core.1} parent=1 // pred_fallthru
      _
    // Predicated region
    $region58: #{lstm_soft_attention_core.1} parent=1 // pred_check
      _
    $region59: #{lstm_soft_attention_core.1} parent=1 // pred_check_branch
      %98 = sbr.rel (0) target = $region61
    $region60: #{lstm_soft_attention_core.1} parent=1 // pred_region
      %100 = dma.done [#allocation7], 64
    $region61: #{lstm_soft_attention_core.1} parent=1 // pred_fallthru
      _
    // Predicated region
    $region62: #{lstm_soft_attention_core.1} parent=1 // pred_check
      _
    $region63: #{lstm_soft_attention_core.1} parent=1 // pred_check_branch
      %102 = sbr.rel (0) target = $region65
    $region64: #{lstm_soft_attention_core.1} parent=1 // pred_region
      %104 = dma.done [#allocation10], 512
    $region65: #{lstm_soft_attention_core.1} parent=1 // pred_fallthru
      _
    // Predicated region
    $region66: #{lstm_soft_attention_core.1} parent=1 // pred_check
      _
    $region67: #{lstm_soft_attention_core.1} parent=1 // pred_check_branch
      %106 = sbr.rel (0) target = $region69
    $region68: #{lstm_soft_attention_core.1} parent=1 // pred_region
      %108 = dma.done [#allocation10], 1024
    $region69: #{lstm_soft_attention_core.1} parent=1 // pred_fallthru
      _
    // Predicated region
    $region70: #{lstm_soft_attention_core.1} parent=1 // pred_check
      _
    $region71: #{lstm_soft_attention_core.1} parent=1 // pred_check_branch
      %110 = sbr.rel (0) target = $region73
    $region72: #{lstm_soft_attention_core.1} parent=1 // pred_region
      %112 = dma.done [#allocation13], 512
    $region73: #{lstm_soft_attention_core.1} parent=1 // pred_fallthru
      _
    %p113 = scmp.eq.s32.totalorder 0, 0
    // Predicated region
    $region74: #{lstm_soft_attention_core.1} parent=1 // pred_check
      %p114 = pneg %p113
    $region75: #{lstm_soft_attention_core.1} parent=1 // pred_check_branch
      %116 = sbr.rel (%p114) target = $region77
    $region76: #{lstm_soft_attention_core.1} parent=1 // pred_region
      %v117 = vld [vmem:[%s2] sm:$0xf]
      %vm118 = vcmask 257024
      %119 = vst.msk [vmem:[#allocation2] sm:$0xf] %vm118, %v117
      %v120 = vld [vmem:[#allocation6] sm:$0xf]
      %121 = vst.msk [vmem:[#allocation3] sm:$0xf] %vm118, %v120
      %v122 = vld [vmem:[%s1] sm:$0xff]
      %v123 = vld [vmem:[%s1 + $0x8] sm:$0xff]
      %v124 = vld [vmem:[%s1 + $0x10] sm:$0xff]
      %v125 = vld [vmem:[%s1 + $0x18] sm:$0xff]
      %v126 = vld [vmem:[%s1 + $0x20] sm:$0xff]
      %v127 = vld [vmem:[%s1 + $0x28] sm:$0xff]
      %v128 = vld [vmem:[%s1 + $0x30] sm:$0xff]
      %v129 = vld [vmem:[%s1 + $0x38] sm:$0xff]
      %v130 = vld [vmem:[%s8] sm:$0xff]
      %v131 = vld [vmem:[%s8 + $0x8] sm:$0xff]
      %v132 = vld [vmem:[%s8 + $0x10] sm:$0xff]
      %v133 = vld [vmem:[%s8 + $0x18] sm:$0xff]
      %v134 = vld [vmem:[%s8 + $0x20] sm:$0xff]
      %v135 = vld [vmem:[%s8 + $0x28] sm:$0xff]
      %v136 = vld [vmem:[%s8 + $0x30] sm:$0xff]
      %v137 = vld [vmem:[%s8 + $0x38] sm:$0xff]
      %v138 = vld [vmem:[%s9] sm:$0x1]
      %v140 = vperm.slane %v138, 0
      %vm142 = vcmask 523264
      %v144 = vsel %vm142, %v122, 0
      %v147 = vsel %vm142, %v123, 0
      %v150 = vsel %vm142, %v124, 0
      %v153 = vsel %vm142, %v125, 0
      %v156 = vsel %vm142, %v126, 0
      %v159 = vsel %vm142, %v127, 0
      %v162 = vsel %vm142, %v128, 0
      %v165 = vsel %vm142, %v129, 0
      %167 = vmatpush.msra.mxu0 0.0
      %168 = vmatpush.msra.mxu0 0.0
      %169 = vmatpush.msra.mxu0 0.0
      %170 = vmatpush.msra.mxu0 0.0
      %171 = vmatpush.msra.mxu0 0.0
      %172 = vmatpush.msra.mxu0 0.0
      %173 = vmatpush.msra.mxu0 0.0
      %174 = vmatpush.msra.mxu0 0.0
      %175 = vmatpush.msra.mxu0 %v137
      %176 = vmatpush.msra.mxu0 %v136
      %177 = vmatpush.msra.mxu0 %v135
      %178 = vmatpush.msra.mxu0 %v134
      %179 = vmatpush.msra.mxu0 %v133
      %180 = vmatpush.msra.mxu0 %v132
      %181 = vmatpush.msra.mxu0 %v131
      %182 = vmatpush.msra.mxu0 %v130
      %183 = vmatmul.f32.gmra.mxu0 %v144
      %v184 = vpop.f32.mrf.mxu0
      %v185 = vadd.f32 %v140, %v184
      %186 = vmatmul.f32.gmra.mxu0 %v147
      %v187 = vpop.f32.mrf.mxu0
      %v188 = vadd.f32 %v140, %v187
      %189 = vmatmul.f32.gmra.mxu0 %v150
      %v190 = vpop.f32.mrf.mxu0
      %v191 = vadd.f32 %v140, %v190
      %192 = vmatmul.f32.gmra.mxu0 %v153
      %v193 = vpop.f32.mrf.mxu0
      %v194 = vadd.f32 %v140, %v193
      %195 = vmatmul.f32.gmra.mxu0 %v156
      %v196 = vpop.f32.mrf.mxu0
      %v197 = vadd.f32 %v140, %v196
      %198 = vmatmul.f32.gmra.mxu0 %v159
      %v199 = vpop.f32.mrf.mxu0
      %v200 = vadd.f32 %v140, %v199
      %201 = vmatmul.f32.gmra.mxu0 %v162
      %v202 = vpop.f32.mrf.mxu0
      %v203 = vadd.f32 %v140, %v202
      %204 = vmatmul.f32.gmra.mxu0 %v165
      %v205 = vpop.f32.mrf.mxu0
      %v206 = vadd.f32 %v140, %v205
      %207 = vdwg.mxu0
      %vm208 = vcmask 261120
      %209 = vst.msk [vmem:[#allocation4] sm:$0xff] %vm208, %v185
      %210 = vst.msk [vmem:[#allocation4 + $0x8] sm:$0xff] %vm208, %v188
      %211 = vst.msk [vmem:[#allocation4 + $0x10] sm:$0xff] %vm208, %v191
      %212 = vst.msk [vmem:[#allocation4 + $0x18] sm:$0xff] %vm208, %v194
      %213 = vst.msk [vmem:[#allocation4 + $0x20] sm:$0xff] %vm208, %v197
      %214 = vst.msk [vmem:[#allocation4 + $0x28] sm:$0xff] %vm208, %v200
      %215 = vst.msk [vmem:[#allocation4 + $0x30] sm:$0xff] %vm208, %v203
      %216 = vst.msk [vmem:[#allocation4 + $0x38] sm:$0xff] %vm208, %v206
    $region77: #{lstm_soft_attention_core.1} parent=1 // pred_fallthru
      _
    %v217 = vld [vmem:[%s0] sm:$0xf]
    %v218 = vld [vmem:[#allocation2] sm:$0xf]
    %v219 = vld [vmem:[#allocation3] sm:$0xf]
    %v220 = vld [vmem:[%s1] sm:$0xff]
    %v221 = vld [vmem:[%s1 + $0x8] sm:$0xff]
    %v222 = vld [vmem:[%s1 + $0x10] sm:$0xff]
    %v223 = vld [vmem:[%s1 + $0x18] sm:$0xff]
    %v224 = vld [vmem:[%s1 + $0x20] sm:$0xff]
    %v225 = vld [vmem:[%s1 + $0x28] sm:$0xff]
    %v226 = vld [vmem:[%s1 + $0x30] sm:$0xff]
    %v227 = vld [vmem:[%s1 + $0x38] sm:$0xff]
    %v228 = vld [vmem:[#allocation12] sm:$0xff]
    %v229 = vld [vmem:[#allocation12 + $0x8] sm:$0xff]
    %v230 = vld [vmem:[#allocation12 + $0x10] sm:$0xff]
    %v231 = vld [vmem:[#allocation12 + $0x18] sm:$0xff]
    %v232 = vld [vmem:[%s11] sm:$0x1]
    %v234 = vperm.slane %v232, 0
    %vm236 = vcmask 261120
    %v238 = vsel %vm236, %v218, 0
    %240 = vmatpush.msra.mxu0 0.0
    %241 = vmatpush.msra.mxu0 0.0
    %242 = vmatpush.msra.mxu0 0.0
    %243 = vmatpush.msra.mxu0 0.0
    %244 = vmatpush.msra.mxu0 0.0
    %245 = vmatpush.msra.mxu0 0.0
    %246 = vmatpush.msra.mxu0 0.0
    %247 = vmatpush.msra.mxu0 0.0
    %248 = vmatpush.msra.mxu0 0.0
    %249 = vmatpush.msra.mxu0 0.0
    %250 = vmatpush.msra.mxu0 0.0
    %251 = vmatpush.msra.mxu0 0.0
    %252 = vmatpush.msra.mxu0 %v231
    %253 = vmatpush.msra.mxu0 %v230
    %254 = vmatpush.msra.mxu0 %v229
    %255 = vmatpush.msra.mxu0 %v228
    %256 = vmatmul.f32.gmra.mxu0 %v238
    %v257 = vpop.f32.mrf.mxu0
    %v258 = vadd.f32 %v234, %v257
    %259 = vdwg.mxu0
    %v260 = vld [vmem:[#allocation4] sm:$0xff]
    %v261 = vld [vmem:[#allocation4 + $0x8] sm:$0xff]
    %v262 = vld [vmem:[#allocation4 + $0x10] sm:$0xff]
    %v263 = vld [vmem:[#allocation4 + $0x18] sm:$0xff]
    %v264 = vld [vmem:[#allocation4 + $0x20] sm:$0xff]
    %v265 = vld [vmem:[#allocation4 + $0x28] sm:$0xff]
    %v266 = vld [vmem:[#allocation4 + $0x30] sm:$0xff]
    %v267 = vld [vmem:[#allocation4 + $0x38] sm:$0xff]
    %v269 = vrot.slane %v258, 1
    %v270 = vrot.slane %v258, 2
    %v271 = vrot.slane %v258, 3
    %v272 = vperm.slane %v258, 0
    %v273 = vperm.slane %v269, 0
    %v274 = vperm.slane %v270, 0
    %v275 = vperm.slane %v271, 0
    %v280 = vadd.f32 %v260, %v272
    %v281 = vadd.f32 %v261, %v272
    %v282 = vadd.f32 %v262, %v273
    %v283 = vadd.f32 %v263, %v273
    %v284 = vadd.f32 %v264, %v274
    %v285 = vadd.f32 %v265, %v274
    %v286 = vadd.f32 %v266, %v275
    %v287 = vadd.f32 %v267, %v275
    %v288 = vtanh.pop %v280
    %v289 = vtanh.pop %v281
    %v290 = vtanh.pop %v282
    %v291 = vtanh.pop %v283
    %v292 = vtanh.pop %v284
    %v293 = vtanh.pop %v285
    %v294 = vtanh.pop %v286
    %v295 = vtanh.pop %v287
    %v296 = vld [vmem:[%s12] sm:$0x1]
    %v298 = vperm.slane %v296, 0
    %v300 = vmul.f32 %v288, %v298
    %v301 = vmul.f32 %v289, %v298
    %v302 = vmul.f32 %v290, %v298
    %v303 = vmul.f32 %v291, %v298
    %v304 = vmul.f32 %v292, %v298
    %v305 = vmul.f32 %v293, %v298
    %v306 = vmul.f32 %v294, %v298
    %v307 = vmul.f32 %v295, %v298
    %v308 = vsel %vm236, %v300, 0.0
    %309 = vadd.xlane.f32.xlu0 %v308
    %v310 = vpop.xlane.xlu0 %309
    %v311 = vsel %vm236, %v301, 0.0
    %312 = vadd.xlane.f32.xlu0 %v311
    %v313 = vpop.xlane.xlu0 %312
    %v314 = vsel %vm236, %v302, 0.0
    %315 = vadd.xlane.f32.xlu0 %v314
    %v316 = vpop.xlane.xlu0 %315
    %v317 = vsel %vm236, %v303, 0.0
    %318 = vadd.xlane.f32.xlu0 %v317
    %v319 = vpop.xlane.xlu0 %318
    %v320 = vsel %vm236, %v304, 0.0
    %321 = vadd.xlane.f32.xlu0 %v320
    %v322 = vpop.xlane.xlu0 %321
    %v323 = vsel %vm236, %v305, 0.0
    %324 = vadd.xlane.f32.xlu0 %v323
    %v325 = vpop.xlane.xlu0 %324
    %v326 = vsel %vm236, %v306, 0.0
    %327 = vadd.xlane.f32.xlu0 %v326
    %v328 = vpop.xlane.xlu0 %327
    %v329 = vsel %vm236, %v307, 0.0
    %330 = vadd.xlane.f32.xlu0 %v329
    %v331 = vpop.xlane.xlu0 %330
    %v332 = vld [vmem:[#allocation5] sm:$0x1]
    %s333 = vtos %v332
    %v334 = vstv %s333
    %v335 = vadd.f32 %v310, %v334
    %v336 = vadd.f32 %v313, %v334
    %v337 = vadd.f32 %v316, %v334
    %v338 = vadd.f32 %v319, %v334
    %v339 = vadd.f32 %v322, %v334
    %v340 = vadd.f32 %v325, %v334
    %v341 = vadd.f32 %v328, %v334
    %v342 = vadd.f32 %v331, %v334
    %v351 = vlaneseq
    %v352 = vand.u32 %v351, 127
    %v353 = vperm.slane %v335, %v352
    %v354 = vadd.s32 %v352, 4294967288
    %v355 = vperm.slane %v336, %v354
    %vm356 = vcmask 130112
    %v357 = vsel %vm356, %v355, %v353
    %v358 = vperm.slane %v337, %v352
    %v359 = vperm.slane %v338, %v354
    %v360 = vsel %vm356, %v359, %v358
    %v361 = vperm.slane %v339, %v352
    %v362 = vperm.slane %v340, %v354
    %v363 = vsel %vm356, %v362, %v361
    %v364 = vperm.slane %v341, %v352
    %v365 = vperm.slane %v342, %v354
    %v366 = vsel %vm356, %v365, %v364
    %vm367 = vcmask 1041409
    %v368 = vsel %vm367, %v360, %v357
    %vm369 = vcmask 1042434
    %v370 = vsel %vm369, %v363, %v368
    %vm371 = vcmask 1043459
    %v372 = vsel %vm371, %v366, %v370
    %vm374 = vcmask 125952
    %v375 = vsel %vm374, %v372, -inf
    %376 = vmax.xlane.f32.xlu0 %v375
    %v377 = vpop.xlane.xlu0 %376
    %v379 = vperm.slane %v377, 0
    %v380 = vperm.slane %v377, 1
    %v381 = vperm.slane %v377, 2
    %v382 = vperm.slane %v377, 3
    %v387 = vsub.f32 %v335, %v379
    %v388 = vsub.f32 %v336, %v379
    %v389 = vsub.f32 %v337, %v380
    %v390 = vsub.f32 %v338, %v380
    %v391 = vsub.f32 %v339, %v381
    %v392 = vsub.f32 %v340, %v381
    %v393 = vsub.f32 %v341, %v382
    %v394 = vsub.f32 %v342, %v382
    %v395 = vmul.f32 %v387, 1.442695
    %v396 = vpow.pop %v395
    %v397 = vmul.f32 %v388, 1.442695
    %v398 = vpow.pop %v397
    %v399 = vmul.f32 %v389, 1.442695
    %v400 = vpow.pop %v399
    %v401 = vmul.f32 %v390, 1.442695
    %v402 = vpow.pop %v401
    %v403 = vmul.f32 %v391, 1.442695
    %v404 = vpow.pop %v403
    %v405 = vmul.f32 %v392, 1.442695
    %v406 = vpow.pop %v405
    %v407 = vmul.f32 %v393, 1.442695
    %v408 = vpow.pop %v407
    %v409 = vmul.f32 %v394, 1.442695
    %v410 = vpow.pop %v409
    %419 = vset.pattern.permute.xlu0 0
    %420 = vperm.xlu0 %419, %v396
    %v421 = vpop.permute.xlu0 %420
    %422 = vset.pattern.permute.xlu0 0
    %423 = vperm.xlu0 %422, %v398
    %v424 = vpop.permute.xlu0 %423
    %425 = vset.pattern.permute.xlu0 0
    %426 = vperm.xlu0 %425, %v400
    %v427 = vpop.permute.xlu0 %426
    %428 = vset.pattern.permute.xlu0 0
    %429 = vperm.xlu0 %428, %v402
    %v430 = vpop.permute.xlu0 %429
    %431 = vset.pattern.permute.xlu0 0
    %432 = vperm.xlu0 %431, %v404
    %v433 = vpop.permute.xlu0 %432
    %434 = vset.pattern.permute.xlu0 0
    %435 = vperm.xlu0 %434, %v406
    %v436 = vpop.permute.xlu0 %435
    %437 = vset.pattern.permute.xlu0 0
    %438 = vperm.xlu0 %437, %v408
    %v439 = vpop.permute.xlu0 %438
    %440 = vset.pattern.permute.xlu0 0
    %441 = vperm.xlu0 %440, %v410
    %v442 = vpop.permute.xlu0 %441
    %v443 = vperm.slane %v421, %v352
    %v444 = vperm.slane %v424, %v354
    %v445 = vsel %vm356, %v444, %v443
    %v446 = vperm.slane %v427, %v352
    %v447 = vperm.slane %v430, %v354
    %v448 = vsel %vm356, %v447, %v446
    %v449 = vperm.slane %v433, %v352
    %v450 = vperm.slane %v436, %v354
    %v451 = vsel %vm356, %v450, %v449
    %v452 = vperm.slane %v439, %v352
    %v453 = vperm.slane %v442, %v354
    %v454 = vsel %vm356, %v453, %v452
    %v455 = vsel %vm367, %v448, %v445
    %v456 = vsel %vm369, %v451, %v455
    %v457 = vsel %vm371, %v454, %v456
    %v459 = vsel %vm374, %v457, 0.0
    %460 = vadd.xlane.f32.xlu0 %v459
    %v461 = vpop.xlane.xlu0 %460
    %v462 = vrcp.pop %v461
    %v464 = vperm.slane %v462, 0
    %v465 = vperm.slane %v462, 1
    %v466 = vperm.slane %v462, 2
    %v467 = vperm.slane %v462, 3
    %v472 = vmul.f32 %v396, %v464
    %v473 = vmul.f32 %v398, %v464
    %v474 = vmul.f32 %v400, %v465
    %v475 = vmul.f32 %v402, %v465
    %v476 = vmul.f32 %v404, %v466
    %v477 = vmul.f32 %v406, %v466
    %v478 = vmul.f32 %v408, %v467
    %v479 = vmul.f32 %v410, %v467
    %481 = vset.pattern.permute.xlu0 0
    %482 = vperm.xlu0 %481, %v472
    %v483 = vpop.permute.xlu0 %482
    %486 = vset.pattern.permute.xlu0 0
    %487 = vperm.xlu0 %486, %v473
    %v488 = vpop.permute.xlu0 %487
    %491 = vset.pattern.permute.xlu0 0
    %492 = vperm.xlu0 %491, %v474
    %v493 = vpop.permute.xlu0 %492
    %496 = vset.pattern.permute.xlu0 0
    %497 = vperm.xlu0 %496, %v475
    %v498 = vpop.permute.xlu0 %497
    %501 = vset.pattern.permute.xlu0 0
    %502 = vperm.xlu0 %501, %v476
    %v503 = vpop.permute.xlu0 %502
    %506 = vset.pattern.permute.xlu0 0
    %507 = vperm.xlu0 %506, %v477
    %v508 = vpop.permute.xlu0 %507
    %511 = vset.pattern.permute.xlu0 0
    %512 = vperm.xlu0 %511, %v478
    %v513 = vpop.permute.xlu0 %512
    %516 = vset.pattern.permute.xlu0 0
    %517 = vperm.xlu0 %516, %v479
    %v518 = vpop.permute.xlu0 %517
    %v520 = vmul.f32 %v483, %v220
    %v521 = vmul.f32 %v488, %v221
    %v522 = vmul.f32 %v493, %v222
    %v523 = vmul.f32 %v498, %v223
    %v524 = vmul.f32 %v503, %v224
    %v525 = vmul.f32 %v508, %v225
    %v526 = vmul.f32 %v513, %v226
    %v527 = vmul.f32 %v518, %v227
    %vm528 = vcmask 523264
    %v529 = vsel %vm528, %v520, 0.0
    %v530 = vsel %vm528, %v521, 0.0
    %v531 = vadd.f32 %v529, %v530
    %v532 = vrot.slane %v531, 4
    %v533 = vadd.f32 %v531, %v532
    %v534 = vrot.slane %v533, 2
    %v535 = vadd.f32 %v533, %v534
    %v536 = vrot.slane %v535, 1
    %v537 = vadd.f32 %v535, %v536
    %v538 = vsel %vm528, %v522, 0.0
    %v539 = vsel %vm528, %v523, 0.0
    %v540 = vadd.f32 %v538, %v539
    %v541 = vrot.slane %v540, 4
    %v542 = vadd.f32 %v540, %v541
    %v543 = vrot.slane %v542, 2
    %v544 = vadd.f32 %v542, %v543
    %v545 = vrot.slane %v544, 1
    %v546 = vadd.f32 %v544, %v545
    %v547 = vsel %vm528, %v524, 0.0
    %v548 = vsel %vm528, %v525, 0.0
    %v549 = vadd.f32 %v547, %v548
    %v550 = vrot.slane %v549, 4
    %v551 = vadd.f32 %v549, %v550
    %v552 = vrot.slane %v551, 2
    %v553 = vadd.f32 %v551, %v552
    %v554 = vrot.slane %v553, 1
    %v555 = vadd.f32 %v553, %v554
    %v556 = vsel %vm528, %v526, 0.0
    %v557 = vsel %vm528, %v527, 0.0
    %v558 = vadd.f32 %v556, %v557
    %v559 = vrot.slane %v558, 4
    %v560 = vadd.f32 %v558, %v559
    %v561 = vrot.slane %v560, 2
    %v562 = vadd.f32 %v560, %v561
    %v563 = vrot.slane %v562, 1
    %v564 = vadd.f32 %v562, %v563
    %v565 = vld [vmem:[%s4] sm:$0xff]
    %v566 = vld [vmem:[%s4 + $0x8] sm:$0xff]
    %v567 = vld [vmem:[%s4 + $0x10] sm:$0xff]
    %v568 = vld [vmem:[%s4 + $0x18] sm:$0xff]
    %v569 = vld [vmem:[#allocation9] sm:$0xff]
    %v570 = vld [vmem:[#allocation9 + $0x8] sm:$0xff]
    %v571 = vld [vmem:[#allocation9 + $0x10] sm:$0xff]
    %v572 = vld [vmem:[#allocation9 + $0x18] sm:$0xff]
    %573 = vmatpush.msra.mxu0 0.0
    %574 = vmatpush.msra.mxu0 0.0
    %575 = vmatpush.msra.mxu0 0.0
    %576 = vmatpush.msra.mxu0 0.0
    %577 = vmatpush.msra.mxu0 0.0
    %578 = vmatpush.msra.mxu0 0.0
    %579 = vmatpush.msra.mxu0 0.0
    %580 = vmatpush.msra.mxu0 0.0
    %581 = vmatpush.msra.mxu0 0.0
    %582 = vmatpush.msra.mxu0 0.0
    %583 = vmatpush.msra.mxu0 0.0
    %584 = vmatpush.msra.mxu0 0.0
    %585 = vmatpush.msra.mxu0 %v572
    %586 = vmatpush.msra.mxu0 %v571
    %587 = vmatpush.msra.mxu0 %v570
    %588 = vmatpush.msra.mxu0 %v569
    %589 = vmatmul.f32.gmra.mxu0 %v238
    %v590 = vpop.f32.mrf.mxu0
    %v591 = vadd.f32 0.0, %v590
    %592 = vdwg.mxu0
    %v594 = vsel %vm236, %v217, 0
    %596 = vmatpush.msra.mxu0 0.0
    %597 = vmatpush.msra.mxu0 0.0
    %598 = vmatpush.msra.mxu0 0.0
    %599 = vmatpush.msra.mxu0 0.0
    %600 = vmatpush.msra.mxu0 0.0
    %601 = vmatpush.msra.mxu0 0.0
    %602 = vmatpush.msra.mxu0 0.0
    %603 = vmatpush.msra.mxu0 0.0
    %604 = vmatpush.msra.mxu0 0.0
    %605 = vmatpush.msra.mxu0 0.0
    %606 = vmatpush.msra.mxu0 0.0
    %607 = vmatpush.msra.mxu0 0.0
    %608 = vmatpush.msra.mxu0 %v568
    %609 = vmatpush.msra.mxu0 %v567
    %610 = vmatpush.msra.mxu0 %v566
    %611 = vmatpush.msra.mxu0 %v565
    %612 = vmatmul.f32.gmra.mxu0 %v594
    %v613 = vpop.f32.mrf.mxu0
    %v614 = vadd.f32 %v591, %v613
    %615 = vdwg.mxu0
    %v616 = vld [vmem:[#allocation11] sm:$0xff]
    %v617 = vld [vmem:[#allocation11 + $0x8] sm:$0xff]
    %v618 = vld [vmem:[#allocation11 + $0x10] sm:$0xff]
    %v619 = vld [vmem:[#allocation11 + $0x18] sm:$0xff]
    %v620 = vld [vmem:[#allocation11 + $0x20] sm:$0xff]
    %v621 = vld [vmem:[#allocation11 + $0x28] sm:$0xff]
    %v622 = vld [vmem:[#allocation11 + $0x30] sm:$0xff]
    %v623 = vld [vmem:[#allocation11 + $0x38] sm:$0xff]
    %v628 = vsel %vm367, %v546, %v537
    %v629 = vsel %vm369, %v555, %v628
    %v630 = vsel %vm371, %v564, %v629
    %v631 = vsel %vm528, %v630, 0
    %633 = vmatpush.msra.mxu0 0.0
    %634 = vmatpush.msra.mxu0 0.0
    %635 = vmatpush.msra.mxu0 0.0
    %636 = vmatpush.msra.mxu0 0.0
    %637 = vmatpush.msra.mxu0 0.0
    %638 = vmatpush.msra.mxu0 0.0
    %639 = vmatpush.msra.mxu0 0.0
    %640 = vmatpush.msra.mxu0 0.0
    %641 = vmatpush.msra.mxu0 %v623
    %642 = vmatpush.msra.mxu0 %v622
    %643 = vmatpush.msra.mxu0 %v621
    %644 = vmatpush.msra.mxu0 %v620
    %645 = vmatpush.msra.mxu0 %v619
    %646 = vmatpush.msra.mxu0 %v618
    %647 = vmatpush.msra.mxu0 %v617
    %648 = vmatpush.msra.mxu0 %v616
    %649 = vmatmul.f32.gmra.mxu0 %v631
    %v650 = vpop.f32.mrf.mxu0
    %v651 = vadd.f32 0.0, %v650
    %652 = vdwg.mxu0
    %v653 = vadd.f32 %v614, %v651
    %v654 = vld [vmem:[%s7] sm:$0x1]
    %v656 = vperm.slane %v654, 0
    %v658 = vadd.f32 %v653, %v656
    %v659 = vxor.u32 %v658, 2147483648
    %v660 = vmul.f32 %v659, 1.442695
    %v661 = vpow.pop %v660
    %v662 = vadd.f32 %v661, 1.0
    %v663 = vrcp.pop %v662
    %v664 = vmul.f32 %v662, %v663
    %v665 = vsub.f32 1.0, %v664
    %v666 = vmul.f32 %v663, %v665
    %v667 = vadd.f32 %v663, %v666
    %vm668 = vweird.f32 %v662
    %vm669 = vweird.f32 %v663
    %vm670 = vmor %vm668, %vm669
    %v671 = vsel %vm670, %v663, %v667
    %v672 = vand.u32 2147483647, %v662
    %vm673 = vcmp.eq.f32.partialorder %v672, 8.507059e+37
    %v674 = vand.u32 %v662, 2147483648
    %v675 = vor.u32 1.1754944e-38, %v674
    %v676 = vsel %vm673, %v675, %v671
    %v677 = vmul.f32 1.0, %v676
    %v678 = vtanh.pop %v658
    %680 = vrot.lane.b32.xlu0 %v219, 32
    %v681 = vpop.permute.xlu0 %680
    %v683 = vmul.f32 %v677, %v681
    %685 = vrot.lane.b32.xlu0 %v678, 32
    %v686 = vpop.permute.xlu0 %685
    %v688 = vmul.f32 %v677, %v686
    %690 = vrot.lane.b32.xlu0 %v688, 32
    %v691 = vpop.permute.xlu0 %690
    %v693 = vadd.f32 %v683, %v691
    %v694 = vtanh.pop %v693
    %696 = vrot.lane.b32.xlu0 %v694, 32
    %v697 = vpop.permute.xlu0 %696
    %v699 = vmul.f32 %v677, %v697
    %701 = vrot.lane.b32.xlu0 %v699, 64
    %v702 = vpop.permute.xlu0 %701
    %vm704 = vcmask 257024
    %705 = vst.msk [vmem:[#allocation2] sm:$0xf] %vm704, %v702
    %707 = vrot.lane.b32.xlu0 %v693, 96
    %v708 = vpop.permute.xlu0 %707
    %710 = vst.msk [vmem:[#allocation3] sm:$0xf] %vm704, %v708
    %711 = vst.msk [vmem:[%s14] sm:$0xf] %vm704, %v702
    %712 = vst.msk [vmem:[#allocation14] sm:$0xf] %vm704, %v708
    // Predicated region
    $region78: #{lstm_soft_attention_core.1} parent=1 // pred_check
      _
    $region79: #{lstm_soft_attention_core.1} parent=1 // pred_check_branch
      %714 = sbr.rel (0) target = $region81
    $region80: #{lstm_soft_attention_core.1} parent=1 // pred_region
      _
    $region81: #{lstm_soft_attention_core.1} parent=1 // pred_fallthru
      _
    // Predicated region
    $region82: #{lstm_soft_attention_core.1} parent=1 // pred_check
      _
    $region83: #{lstm_soft_attention_core.1} parent=1 // pred_check_branch
      %716 = sbr.rel (0) target = $region85
    $region84: #{lstm_soft_attention_core.1} parent=1 // pred_region
      %718 = vsyncadd [#allocation8], 0
      %s720 = sshll.u32 [#allocation14], 4
      %s721 = int_to_ptr.vmem [resolvable:$true] %s720
      %s722 = sshll.u32 %s15, 4
      %s723 = int_to_ptr.hbm [resolvable:$true] %s722
      %725 = dma.vmem_to_hbm [thread:$0]  %s721, 64, %s723, [#allocation8]
    $region85: #{lstm_soft_attention_core.1} parent=1 // pred_fallthru
      _
    // Predicated region
    $region86: #{lstm_soft_attention_core.1} parent=1 // pred_check
      _
    $region87: #{lstm_soft_attention_core.1} parent=1 // pred_check_branch
      %727 = sbr.rel (0) target = $region89
    $region88: #{lstm_soft_attention_core.1} parent=1 // pred_region
      _
    $region89: #{lstm_soft_attention_core.1} parent=1 // pred_fallthru
      _
    // Predicated region
    $region90: #{lstm_soft_attention_core.1} parent=1 // pred_check
      _
    $region91: #{lstm_soft_attention_core.1} parent=1 // pred_check_branch
      %729 = sbr.rel (0) target = $region93
    $region92: #{lstm_soft_attention_core.1} parent=1 // pred_region
      %731 = dma.done [#allocation8], 64
    $region93: #{lstm_soft_attention_core.1} parent=1 // pred_fallthru
      _
    %732 = vsyncpa [#allocation7], 1
    %733 = vsyncpa [#allocation10], 1
    %734 = vsyncpa [#allocation13], 1
    %735 = vsyncpa [#allocation8], 1

</llo_original>
